<compile_context>
chip_gen: v6e
topology: v6e:2x2x1
jax: 0.10.0
libtpu: 0.0.40
codegen_flags: <defaults>
</compile_context>

<pallas_src>
import jax
import jax.numpy as jnp
from jax.experimental import pallas as pl
from jax.experimental.pallas import tpu as pltpu

LANE = 128
SUBLANE = 8

MAX_DST_TILE = 512          # dst-row tile cap (multiple of 8)
MAX_SRC_CHUNK = 512         # src reduction chunk (multiple of 128)
VMEM_LIMIT_BYTES = 48 * 1024 * 1024   # explicit scoped-VMEM budget (fits v7x 64 MiB/TC)


# ----------------------------------------------------------------------------- #
# small helpers
# ----------------------------------------------------------------------------- #
def _round_up(x, m):
    return (x + m - 1) // m * m


def _pad2(x, rows, cols):
    r, c = x.shape
    if r == rows and c == cols:
        return x
    return jnp.pad(x, ((0, rows - r), (0, cols - c)))


def _fit_rows(x, rows):
    r = x.shape[0]
    if r == rows:
        return x
    if r > rows:
        return x[:rows]              # only ever drops padding rows
    return jnp.pad(x, ((0, rows - r), (0, 0)))


def _row_tiling(n, max_tile):
    """(tile, padded_rows): tile is a multiple of 8, padded_rows a multiple of tile."""
    n8 = _round_up(max(n, 1), SUBLANE)
    if n8 <= max_tile:
        return n8, n8
    return max_tile, _round_up(n8, max_tile)


def _full_spec(shape):
    nd = len(shape)
    return pl.BlockSpec(tuple(shape), lambda *_: (0,) * nd)


def _compiler_params(sem):
    return pltpu.CompilerParams(dimension_semantics=sem,
                                vmem_limit_bytes=VMEM_LIMIT_BYTES)


# ----------------------------------------------------------------------------- #
# Stage A: src stage — n_src = relu(q(h_src)), plus item_proj for layer 0.
# Computed ONCE per src row (hoisted out of the dst loop).
# ----------------------------------------------------------------------------- #
def _src_stage0_kernel(raw_ref, pw_ref, pb_ref, qw_ref, qb_ref, hproj_ref, nsrc_ref):
    h = jnp.dot(raw_ref[...], pw_ref[...],
                preferred_element_type=jnp.float32) + pb_ref[...]
    hproj_ref[...] = h.astype(hproj_ref.dtype)
    n = jnp.dot(h.astype(jnp.bfloat16), qw_ref[...],
                preferred_element_type=jnp.float32) + qb_ref[...]
    nsrc_ref[...] = jnp.maximum(n, 0.0).astype(nsrc_ref.dtype)


def _src_stage_kernel(h_ref, qw_ref, qb_ref, nsrc_ref):
    n = jnp.dot(h_ref[...], qw_ref[...],
                preferred_element_type=jnp.float32) + qb_ref[...]
    nsrc_ref[...] = jnp.maximum(n, 0.0).astype(nsrc_ref.dtype)


def pallas_src_stage(h_src, q_w, q_b, proj=None, *, e_pad, ts):
    s_pad, feat = h_src.shape
    grid = (s_pad // ts,)
    row_spec = pl.BlockSpec((ts, feat), lambda i: (i, 0))
    out_row_spec = pl.BlockSpec((ts, e_pad), lambda i: (i, 0))

    if proj is not None:                     # layer 0: fuse item_proj in front
        p_w, p_b = proj
        kernel = _src_stage0_kernel
        in_specs = [row_spec, _full_spec(p_w.shape), _full_spec(p_b.shape),
                    _full_spec(q_w.shape), _full_spec(q_b.shape)]
        args = (h_src, p_w, p_b, q_w, q_b)
        out_shape = (jax.ShapeDtypeStruct((s_pad, e_pad), jnp.bfloat16),
                     jax.ShapeDtypeStruct((s_pad, e_pad), jnp.bfloat16))
        out_specs = [out_row_spec,
                     pl.BlockSpec((ts, e_pad), lambda i: (i, 0))]
    else:
        kernel = _src_stage_kernel
        in_specs = [row_spec, _full_spec(q_w.shape), _full_spec(q_b.shape)]
        args = (h_src, q_w, q_b)
        out_shape = jax.ShapeDtypeStruct((s_pad, e_pad), jnp.bfloat16)
        out_specs = out_row_spec

    return pl.pallas_call(
        kernel,
        out_shape=out_shape,
        grid_spec=pltpu.PrefetchScalarGridSpec(
            num_scalar_prefetch=0, grid=grid,
            in_specs=in_specs, out_specs=out_specs),
        compiler_params=_compiler_params(("parallel",)),
    )(*args)


# ----------------------------------------------------------------------------- #
# Stage B: dst stage — accumulate agg = A @ n_src over src chunks, then
#   z = relu(concat([h_dst, agg * inv_ws]) @ W + b)   (single K = 2*e_pad matmul)
#   h = z / max(||z||, nonzero)
#   [final layer] out = relu(h @ G1 + b1) @ G2
# ----------------------------------------------------------------------------- #
def _make_dst_kernel(fuse_head):
    def kernel(*refs):
        it = iter(refs)
        a_ref = next(it)        # adjacency tile (tm, tk), bf16, 0 == no edge
        n_ref = next(it)        # n_src chunk  (tk, e_pad), bf16
        hd_ref = next(it)       # h_dst tile   (tm, e_pad), bf16
        iw_ref = next(it)       # 1/clamp(sum w, 1) (tm, 1), f32 (exact, precomputed)
        w_ref = next(it)        # fused W      (2*e_pad, e_pad), bf16
        wb_ref = next(it)       # bias         (1, e_pad), f32
        if fuse_head:
            g1w_ref = next(it); g1b_ref = next(it); g2w_ref = next(it)
        o_ref = next(it)
        acc_ref = next(it)      # f32 VMEM accumulator (tm, e_pad)

        j = pl.program_id(1)

        @pl.when(j == 0)
        def _():
            acc_ref[...] = jnp.zeros_like(acc_ref)

        # u_mul_e('n','w') + sum over this src chunk
        acc_ref[...] += jnp.dot(a_ref[...], n_ref[...],
                                preferred_element_type=jnp.float32)

        @pl.when(j == pl.num_programs(1) - 1)
        def _():
            neigh = acc_ref[...] * iw_ref[...]                    # exact / clamp(ws,1)
            x = jnp.concatenate([hd_ref[...], neigh.astype(jnp.bfloat16)], axis=-1)
            z = jnp.dot(x, w_ref[...],
                        preferred_element_type=jnp.float32) + wb_ref[...]
            z = jnp.maximum(z, 0.0)
            sumsq = jnp.sum(z * z, axis=1, keepdims=True)
            inv_norm = jnp.where(sumsq == 0.0, 1.0, jax.lax.rsqrt(sumsq))
            h = z * inv_norm
            if fuse_head:
                g1 = jnp.dot(h.astype(jnp.bfloat16), g1w_ref[...],
                             preferred_element_type=jnp.float32) + g1b_ref[...]
                g1 = jnp.maximum(g1, 0.0)
                h = jnp.dot(g1.astype(jnp.bfloat16), g2w_ref[...],
                            preferred_element_type=jnp.float32)   # G2 has no bias
            o_ref[...] = h.astype(o_ref.dtype)

    return kernel


def pallas_dst_stage(adj, n_src, h_for_dst, inv_ws, w, wb, head, *,
                     tm, tk, e_pad, out_dtype):
    d_pad, s_pad = adj.shape
    grid = (d_pad // tm, s_pad // tk)

    in_specs = [
        pl.BlockSpec((tm, tk), lambda i, j: (i, j)),       # adjacency tile
        pl.BlockSpec((tk, e_pad), lambda i, j: (j, 0)),    # n_src chunk
        pl.BlockSpec((tm, e_pad), lambda i, j: (i, 0)),    # h_dst rows of src repr
        pl.BlockSpec((tm, 1), lambda i, j: (i, 0)),        # inv_ws
        _full_spec(w.shape), _full_spec(wb.shape),
    ]
    args = [adj, n_src, h_for_dst, inv_ws, w, wb]
    if head is not None:
        for t in head:
            in_specs.append(_full_spec(t.shape))
            args.append(t)

    return pl.pallas_call(
        _make_dst_kernel(head is not None),
        out_shape=jax.ShapeDtypeStruct((d_pad, e_pad), out_dtype),
        grid_spec=pltpu.PrefetchScalarGridSpec(
            num_scalar_prefetch=0, grid=grid,
            in_specs=in_specs,
            out_specs=pl.BlockSpec((tm, e_pad), lambda i, j: (i, 0)),
            scratch_shapes=[pltpu.VMEM((tm, e_pad), jnp.float32)]),
        compiler_params=_compiler_params(("parallel", "arbitrary")),
    )(*args)


# ----------------------------------------------------------------------------- #
# Parameter setup + graph preparation + embedding-gather glue (plain JAX)
# ----------------------------------------------------------------------------- #
def xavier(key, shape, gain=1.0):
    fan_in, fan_out = shape
    limit = gain * jnp.sqrt(6.0 / (fan_in + fan_out))
    return jax.random.uniform(key, shape, jnp.float32, -limit, limit)


def init_params(key, *, n_items, sparse_feat_size, dense_field_size,
                n_item_cols, embed_size, num_layers):
    gain_relu = jnp.sqrt(2.0)                       # nn.init.calculate_gain('relu')
    e = embed_size
    e_pad = _round_up(e, LANE)
    din = (n_item_cols + 1) * e
    din_pad = _round_up(din, LANE)
    keys = iter(jax.random.split(key, 6 + 2 * num_layers))

    def w_pad(k, shape, rows, cols, gain=1.0):
        # Xavier on the logical shape, zero-pad to lane-dense shape, cast to bf16.
        return _pad2(xavier(k, shape, gain), rows, cols).astype(jnp.bfloat16)

    p = {
        "e_pad": e_pad,
        "item_embeds": xavier(next(keys), (n_items, e)),
        "sparse_embeds": xavier(next(keys), (sparse_feat_size, e)),
        "dense_embeds": xavier(next(keys), (dense_field_size, e)),
        # Linear weights stored pre-transposed [in, out]; biases stay f32 (post-accumulate).
        "item_proj_w": w_pad(next(keys), (din, e), din_pad, e_pad),
        "item_proj_b": jnp.zeros((1, e_pad), jnp.float32),
        "G1_w": w_pad(next(keys), (e, e), e_pad, e_pad, gain_relu),
        "G1_b": jnp.zeros((1, e_pad), jnp.float32),
        "G2_w": w_pad(next(keys), (e, e), e_pad, e_pad),
        "q_w": [], "q_b": [], "w_w": [], "w_b": [],
    }
    for _ in range(num_layers):
        p["q_w"].append(w_pad(next(keys), (e, e), e_pad, e_pad, gain_relu))
        p["q_b"].append(jnp.zeros((1, e_pad), jnp.float32))
        # Fused W kept as ONE [2e, e] matrix: rows [0:e) multiply h_dst, rows
        # [e_pad:e_pad+e) multiply the aggregated neighbors (single K=2*e_pad matmul).
        ww = xavier(next(keys), (2 * e, e), gain_relu)
        wf = jnp.zeros((2 * e_pad, e_pad), jnp.float32)
        wf = wf.at[:e, :e].set(ww[:e])
        wf = wf.at[e_pad:e_pad + e, :e].set(ww[e:])
        p["w_w"].append(wf.astype(jnp.bfloat16))
        p["w_b"].append(jnp.zeros((1, e_pad), jnp.float32))
    return p


def prepare_blocks(adjs):
    """Pad + cast each dense weighted adjacency ONCE (outside the forward step) and
    precompute inv_ws = 1 / clamp(sum_j w_ij, 1) with an exact divide.
    TODO(synk): for production graph sizes, replace the dense padded adjacency with
    fixed-fanout neighbor-index + edge-weight arrays via PrefetchScalarGridSpec gather."""
    blocks = []
    for adj in adjs:
        d, s = adj.shape
        tm, d_pad = _row_tiling(d, MAX_DST_TILE)
        s8 = max(_round_up(max(s, 1), SUBLANE), d_pad)
        if s8 <= MAX_SRC_CHUNK:
            tk, s_pad = s8, s8                      # single chunk == full src extent
        else:
            tk, s_pad = MAX_SRC_CHUNK, _round_up(s8, MAX_SRC_CHUNK)
        a = _pad2(adj.astype(jnp.float32), d_pad, s_pad)
        ws = jnp.maximum(jnp.sum(a, axis=1, keepdims=True), 1.0)   # copy_e + sum, clamp(1)
        blocks.append(dict(n_dst=d, tm=tm, d_pad=d_pad, tk=tk, s_pad=s_pad,
                           adj=a.astype(jnp.bfloat16),             # bf16 HBM/VMEM stream
                           inv_ws=(1.0 / ws).astype(jnp.float32)))
    return blocks


def get_raw_item_features(params, nodes, sparse_indices, dense_values, item_dense_col_idx):
    n = nodes.shape[0]
    sp = params["sparse_embeds"][sparse_indices].reshape(n, -1)          # sparse embeds
    de = params["dense_embeds"][item_dense_col_idx][None, :, :]          # dense embeds
    dn = (de * dense_values[:, :, None]).reshape(n, -1)
    it = params["item_embeds"][nodes]                                    # item id embeds
    return jnp.concatenate([sp, dn, it], axis=1)                         # [n, (cols+1)*E]


def pinsage_dgl_forward(params, blocks, nodes, sparse_indices, dense_values,
                        item_dense_col_idx, embed_size):
    num_layers = len(blocks)
    e_pad = params["e_pad"]
    din_pad = params["item_proj_w"].shape[0]

    raw = get_raw_item_features(params, nodes, sparse_indices, dense_values,
                                item_dense_col_idx)
    # lane-pad features, cast to the MXU dtype; rows fitted per layer below
    h = jnp.pad(raw, ((0, 0), (0, din_pad - raw.shape[1]))).astype(jnp.bfloat16)

    for layer, blk in enumerate(blocks):
        h = _fit_rows(h, blk["s_pad"])
        ts = min(blk["s_pad"], MAX_SRC_CHUNK)
        last = layer == num_layers - 1

        # Stage A: per-src-row work (item_proj for layer 0, q-linear + relu), hoisted
        # out of the dst loop so it is NOT recomputed for every dst tile.
        if layer == 0:
            h_for_dst, n_src = pallas_src_stage(
                h, params["q_w"][0], params["q_b"][0],
                proj=(params["item_proj_w"], params["item_proj_b"]),
                e_pad=e_pad, ts=ts)
        else:
            n_src = pallas_src_stage(h, params["q_w"][layer], params["q_b"][layer],
                                     proj=None, e_pad=e_pad, ts=ts)
            h_for_dst = h

        # Stage B: aggregate + fused W + L2 norm (+ G1/G2 head on the last layer).
        head = (params["G1_w"], params["G1_b"], params["G2_w"]) if last else None
        h = pallas_dst_stage(blk["adj"], n_src, h_for_dst, blk["inv_ws"],
                             params["w_w"][layer], params["w_b"][layer], head,
                             tm=blk["tm"], tk=blk["tk"], e_pad=e_pad,
                             out_dtype=jnp.float32 if last else jnp.bfloat16)

    return h[:blocks[-1]["n_dst"], :embed_size]


# ----------------------------------------------------------------------------- #
if __name__ == "__main__":
    key = jax.random.PRNGKey(0)

    # small synthetic config
    embed_size = 32
    num_layers = 2
    n_items = 50
    sparse_feat_size = 24
    n_item_sparse = 2
    n_item_dense = 1
    dense_field_size = n_item_dense
    item_dense_col_idx = jnp.arange(n_item_dense)        # data_info.item_dense_col.index
    n_item_cols = n_item_sparse + n_item_dense           # len(data_info.item_col)

    # graph blocks: N0 src nodes -> 8 dst -> 4 dst (final batch of items)
    N0, N1, N2 = 16, 8, 4

    k_par, k_nodes, k_sp, k_dn, k_a0, k_a1, k_m0, k_m1 = jax.random.split(key, 8)
    params = init_params(k_par, n_items=n_items, sparse_feat_size=sparse_feat_size,
                         dense_field_size=dense_field_size, n_item_cols=n_item_cols,
                         embed_size=embed_size, num_layers=num_layers)

    nodes = jax.random.randint(k_nodes, (N0,), 0, n_items)
    sparse_indices = jax.random.randint(k_sp, (N0, n_item_sparse), 0, sparse_feat_size)
    dense_values = jax.random.normal(k_dn, (N0, n_item_dense), jnp.float32)

    # dense weighted adjacency per block: [n_dst, n_src], ~50% edges, positive weights
    a0 = jax.random.uniform(k_a0, (N1, N0), jnp.float32, 0.1, 1.0)
    a0 = a0 * (jax.random.uniform(k_m0, (N1, N0)) > 0.5).astype(jnp.float32)
    a1 = jax.random.uniform(k_a1, (N2, N1), jnp.float32, 0.1, 1.0)
    a1 = a1 * (jax.random.uniform(k_m1, (N2, N1)) > 0.5).astype(jnp.float32)

    # pad + cast adjacency and precompute inv_ws ONCE (outside the forward step)
    blocks = prepare_blocks((a0, a1))
    blocks = jax.tree_util.tree_map(jax.block_until_ready, blocks)

    out = pinsage_dgl_forward(params, blocks, nodes, sparse_indices, dense_values,
                              item_dense_col_idx, embed_size)
    out = jax.block_until_ready(out)
    assert out.shape == (N2, embed_size) and out.dtype == jnp.float32
    assert bool(jnp.all(jnp.isfinite(out)))
    print("KERNEL_OK")
</pallas_src>

<mosaic_0001>
module attributes {stable_mosaic.version = 11 : i64} {
  func.func @_src_stage0_kernel(%arg0: i32, %arg1: memref<16x128xbf16, #tpu.memory_space<vmem>>, %arg2: memref<128x128xbf16, #tpu.memory_space<vmem>>, %arg3: memref<1x128xf32, #tpu.memory_space<vmem>>, %arg4: memref<128x128xbf16, #tpu.memory_space<vmem>>, %arg5: memref<1x128xf32, #tpu.memory_space<vmem>>, %arg6: memref<16x128xbf16, #tpu.memory_space<vmem>>, %arg7: memref<16x128xbf16, #tpu.memory_space<vmem>>) attributes {dimension_semantics = [#tpu.dimension_semantics<parallel>], iteration_bounds = array<i64: 1>, scalar_prefetch = 0 : i64, scratch_operands = 0 : i64, tpu.core_type = #tpu.core_type<tc>, window_params = [{transform_indices = @transform_0, window_bounds = array<i64: 16, 128>}, {pipeline_mode = #tpu.pipeline_mode<synchronous>, transform_indices = @transform_1, window_bounds = array<i64: 128, 128>}, {pipeline_mode = #tpu.pipeline_mode<synchronous>, transform_indices = @transform_2, window_bounds = array<i64: 1, 128>}, {pipeline_mode = #tpu.pipeline_mode<synchronous>, transform_indices = @transform_3, window_bounds = array<i64: 128, 128>}, {pipeline_mode = #tpu.pipeline_mode<synchronous>, transform_indices = @transform_4, window_bounds = array<i64: 1, 128>}, {transform_indices = @transform_5, window_bounds = array<i64: 16, 128>}, {transform_indices = @transform_6, window_bounds = array<i64: 16, 128>}]} {
    %c0 = arith.constant 0 : index
    %c0_0 = arith.constant 0 : index
    %0 = vector.load %arg1[%c0, %c0_0] : memref<16x128xbf16, #tpu.memory_space<vmem>>, vector<16x128xbf16>
    %c0_1 = arith.constant 0 : index
    %c0_2 = arith.constant 0 : index
    %1 = vector.load %arg2[%c0_1, %c0_2] : memref<128x128xbf16, #tpu.memory_space<vmem>>, vector<128x128xbf16>
    %cst = arith.constant dense<0.000000e+00> : vector<16x128xf32>
    %2 = tpu.matmul %0, %1, %cst {dimension_numbers = #tpu.dot_dimension_numbers<[1], [0], [0], [1], [0, 0, 1, 1], [], []>} : vector<16x128xbf16>, vector<128x128xbf16>, vector<16x128xf32> -> vector<16x128xf32>
    %c0_3 = arith.constant 0 : index
    %c0_4 = arith.constant 0 : index
    %3 = vector.load %arg3[%c0_3, %c0_4] : memref<1x128xf32, #tpu.memory_space<vmem>>, vector<1x128xf32>
    %4 = vector.broadcast %3 : vector<1x128xf32> to vector<16x128xf32>
    %5 = arith.addf %2, %4 : vector<16x128xf32>
    %6 = arith.truncf %5 : vector<16x128xf32> to vector<16x128xbf16>
    %c0_5 = arith.constant 0 : index
    %c0_6 = arith.constant 0 : index
    %7 = vector.load %arg6[%c0_5, %c0_6] : memref<16x128xbf16, #tpu.memory_space<vmem>>, vector<16x128xbf16>
    tpu.vector_store %arg6[%c0_5, %c0_6], %6 {strides = array<i32>} : memref<16x128xbf16, #tpu.memory_space<vmem>>, vector<16x128xbf16>,
    %8 = arith.truncf %5 : vector<16x128xf32> to vector<16x128xbf16>
    %c0_7 = arith.constant 0 : index
    %c0_8 = arith.constant 0 : index
    %9 = vector.load %arg4[%c0_7, %c0_8] : memref<128x128xbf16, #tpu.memory_space<vmem>>, vector<128x128xbf16>
    %cst_9 = arith.constant dense<0.000000e+00> : vector<16x128xf32>
    %10 = tpu.matmul %8, %9, %cst_9 {dimension_numbers = #tpu.dot_dimension_numbers<[1], [0], [0], [1], [0, 0, 1, 1], [], []>} : vector<16x128xbf16>, vector<128x128xbf16>, vector<16x128xf32> -> vector<16x128xf32>
    %c0_10 = arith.constant 0 : index
    %c0_11 = arith.constant 0 : index
    %11 = vector.load %arg5[%c0_10, %c0_11] : memref<1x128xf32, #tpu.memory_space<vmem>>, vector<1x128xf32>
    %12 = vector.broadcast %11 : vector<1x128xf32> to vector<16x128xf32>
    %13 = arith.addf %10, %12 : vector<16x128xf32>
    %cst_12 = arith.constant 0.000000e+00 : f32
    %14 = vector.broadcast %cst_12 : f32 to vector<16x128xf32>
    %15 = arith.maximumf %13, %14 : vector<16x128xf32>
    %16 = arith.truncf %15 : vector<16x128xf32> to vector<16x128xbf16>
    %c0_13 = arith.constant 0 : index
    %c0_14 = arith.constant 0 : index
    %17 = vector.load %arg7[%c0_13, %c0_14] : memref<16x128xbf16, #tpu.memory_space<vmem>>, vector<16x128xbf16>
    tpu.vector_store %arg7[%c0_13, %c0_14], %16 {strides = array<i32>} : memref<16x128xbf16, #tpu.memory_space<vmem>>, vector<16x128xbf16>,
    return
  }
  func.func @transform_0(%arg0: i32) -> (i32, i32) {
    %c0_i32 = arith.constant 0 : i32
    %c0_i32_0 = arith.constant 0 : i32
    return %arg0, %c0_i32 : i32, i32
  }
  func.func @transform_1(%arg0: i32) -> (i32, i32) {
    %c0_i32 = arith.constant 0 : i32
    %c0_i32_0 = arith.constant 0 : i32
    %c0_i32_1 = arith.constant 0 : i32
    return %c0_i32, %c0_i32_0 : i32, i32
  }
  func.func @transform_2(%arg0: i32) -> (i32, i32) {
    %c0_i32 = arith.constant 0 : i32
    %c0_i32_0 = arith.constant 0 : i32
    %c0_i32_1 = arith.constant 0 : i32
    return %c0_i32, %c0_i32_0 : i32, i32
  }
  func.func @transform_3(%arg0: i32) -> (i32, i32) {
    %c0_i32 = arith.constant 0 : i32
    %c0_i32_0 = arith.constant 0 : i32
    %c0_i32_1 = arith.constant 0 : i32
    return %c0_i32, %c0_i32_0 : i32, i32
  }
  func.func @transform_4(%arg0: i32) -> (i32, i32) {
    %c0_i32 = arith.constant 0 : i32
    %c0_i32_0 = arith.constant 0 : i32
    %c0_i32_1 = arith.constant 0 : i32
    return %c0_i32, %c0_i32_0 : i32, i32
  }
  func.func @transform_5(%arg0: i32) -> (i32, i32) {
    %c0_i32 = arith.constant 0 : i32
    %c0_i32_0 = arith.constant 0 : i32
    return %arg0, %c0_i32 : i32, i32
  }
  func.func @transform_6(%arg0: i32) -> (i32, i32) {
    %c0_i32 = arith.constant 0 : i32
    %c0_i32_0 = arith.constant 0 : i32
    return %arg0, %c0_i32 : i32, i32
  }
}

</mosaic_0001>

<llo_original>
// kernel: tpu_custom_call.1
$region0: #{tpu_custom_call.1}
  #allocation0 [shape = 'u32[]', space=smem, size = 0x4, offset = 0x4, fixed_abs, tag = 'smem constant byte address 0x4 - core index']
  #allocation1 [shape = 'u32[144,128]{1,0:T(1,128)}', space=vmem, size = 0x12000, scoped, tag = 'internal scratch']
  %s0 = inlined_call_operand.hbm [shape: bf16[16,128], index: 0, kind: input, shape index: {}]
  %s1 = inlined_call_operand.hbm [shape: bf16[128,128], index: 1, kind: input, shape index: {}]
  %s2 = inlined_call_operand.vmem [shape: f32[1,128], index: 2, kind: input, shape index: {}]
  %s3 = inlined_call_operand.hbm [shape: bf16[128,128], index: 3, kind: input, shape index: {}]
  %s4 = inlined_call_operand.vmem [shape: f32[1,128], index: 4, kind: input, shape index: {}]
  %s5 = inlined_call_operand.hbm [shape: bf16[16,128], index: 5, kind: output, shape index: {0}]
  %s6 = inlined_call_operand.hbm [shape: bf16[16,128], index: 6, kind: output, shape index: {1}]
  %7 = xla_tuple %s5, %s6
  %s8 = sld [smem:[#allocation0]]
  $region50: #{tpu_custom_call.1} parent=0
    _
  %s10 = ssub.s32 1, %s8
  %s11 = scalar_select 0, %s10, %s8
  $region1: #{tpu_custom_call.1} parent=0
    #allocation2 [shape = 'u8[4096]{0}', space=vmem, size = 0x1000, scoped, tag = 'input window, operand 0, single buffered']
    #allocation3 [shape = 's32[1]{0}', space=sflag, size = 0x4, scoped, tag = 'scoped memory for tpu_custom_call.1']
    #allocation4 [shape = 's32[1]{0}', space=sflag, size = 0x4, scoped, tag = 'scoped memory for tpu_custom_call.1']
    #allocation5 [shape = 'u8[32768]{0}', space=vmem, size = 0x8000, scoped, tag = 'input window, operand 1, single buffered']
    #allocation6 [shape = 's32[1]{0}', space=sflag, size = 0x4, scoped, tag = 'scoped memory for tpu_custom_call.1']
    #allocation7 [shape = 'u8[32768]{0}', space=vmem, size = 0x8000, scoped, tag = 'input window, operand 3, single buffered']
    #allocation8 [shape = 'u8[4096]{0}', space=vmem, size = 0x1000, scoped, tag = 'output window, operand 0, single buffered']
    #allocation9 [shape = 'u8[4096]{0}', space=vmem, size = 0x1000, scoped, tag = 'output window, operand 1, single buffered']
    #allocation10 [shape = 's32[1]{0}', space=sflag, size = 0x4, scoped, tag = 'scoped memory for tpu_custom_call.1']
    %12 = vsyncpa [#allocation3], 0
    %13 = vsyncpa [#allocation6], 0
    %14 = vsyncpa [#allocation4], 0
    %15 = vsyncpa [#allocation10], 0
    // Predicated region
    $region2: #{tpu_custom_call.1} parent=1 // pred_check
      _
    $region3: #{tpu_custom_call.1} parent=1 // pred_check_branch
      %17 = sbr.rel (0) target = $region5
    $region4: #{tpu_custom_call.1} parent=1 // pred_region
      %s19 = ssub.s32 128, 128
      %20 = vsyncadd [#allocation3], %s19
      %s21 = sshll.u32 [#allocation2], 4
      %s22 = int_to_ptr.vmem [resolvable:$true] %s21
      %27 = dma.hbm_to_vmem [thread:$0]  %s0, 128, %s22, [#allocation3], 64, 64, 4
    $region5: #{tpu_custom_call.1} parent=1 // pred_fallthru
      _
    // Predicated region
    $region6: #{tpu_custom_call.1} parent=1 // pred_check
      _
    $region7: #{tpu_custom_call.1} parent=1 // pred_check_branch
      %29 = sbr.rel (0) target = $region9
    $region8: #{tpu_custom_call.1} parent=1 // pred_region
      %s31 = ssub.s32 1024, 1024
      %32 = vsyncadd [#allocation6], %s31
      %s33 = sshll.u32 [#allocation5], 4
      %s34 = int_to_ptr.vmem [resolvable:$true] %s33
      %39 = dma.hbm_to_vmem [thread:$0]  %s1, 1024, %s34, [#allocation6], 64, 64, 4
    $region9: #{tpu_custom_call.1} parent=1 // pred_fallthru
      _
    // Predicated region
    $region10: #{tpu_custom_call.1} parent=1 // pred_check
      _
    $region11: #{tpu_custom_call.1} parent=1 // pred_check_branch
      %41 = sbr.rel (0) target = $region13
    $region12: #{tpu_custom_call.1} parent=1 // pred_region
      _
    $region13: #{tpu_custom_call.1} parent=1 // pred_fallthru
      _
    // Predicated region
    $region14: #{tpu_custom_call.1} parent=1 // pred_check
      _
    $region15: #{tpu_custom_call.1} parent=1 // pred_check_branch
      %43 = sbr.rel (0) target = $region17
    $region16: #{tpu_custom_call.1} parent=1 // pred_region
      %s45 = ssub.s32 1024, 1024
      %46 = vsyncadd [#allocation6], %s45
      %s47 = sshll.u32 [#allocation7], 4
      %s48 = int_to_ptr.vmem [resolvable:$true] %s47
      %53 = dma.hbm_to_vmem [thread:$0]  %s3, 1024, %s48, [#allocation6], 64, 64, 4
    $region17: #{tpu_custom_call.1} parent=1 // pred_fallthru
      _
    // Predicated region
    $region18: #{tpu_custom_call.1} parent=1 // pred_check
      _
    $region19: #{tpu_custom_call.1} parent=1 // pred_check_branch
      %55 = sbr.rel (0) target = $region21
    $region20: #{tpu_custom_call.1} parent=1 // pred_region
      _
    $region21: #{tpu_custom_call.1} parent=1 // pred_fallthru
      _
    // Predicated region
    $region22: #{tpu_custom_call.1} parent=1 // pred_check
      _
    $region23: #{tpu_custom_call.1} parent=1 // pred_check_branch
      %57 = sbr.rel (0) target = $region25
    $region24: #{tpu_custom_call.1} parent=1 // pred_region
      %58 = dma.done [#allocation3], 128
    $region25: #{tpu_custom_call.1} parent=1 // pred_fallthru
      _
    // Predicated region
    $region26: #{tpu_custom_call.1} parent=1 // pred_check
      _
    $region27: #{tpu_custom_call.1} parent=1 // pred_check_branch
      %60 = sbr.rel (0) target = $region29
    $region28: #{tpu_custom_call.1} parent=1 // pred_region
      %61 = dma.done [#allocation6], 1024
    $region29: #{tpu_custom_call.1} parent=1 // pred_fallthru
      _
    // Predicated region
    $region30: #{tpu_custom_call.1} parent=1 // pred_check
      _
    $region31: #{tpu_custom_call.1} parent=1 // pred_check_branch
      %63 = sbr.rel (0) target = $region33
    $region32: #{tpu_custom_call.1} parent=1 // pred_region
      %64 = dma.done [#allocation6], 1024
    $region33: #{tpu_custom_call.1} parent=1 // pred_fallthru
      _
    %v66 = vld [vmem:[#allocation2] sm:$0xf]
    %v67 = vld [vmem:[#allocation2 + $0x4] sm:$0xf]
    %v68 = vld [vmem:[#allocation5] sm:$0xf]
    %v69 = vld [vmem:[#allocation5 + $0x4] sm:$0xf]
    %v70 = vld [vmem:[#allocation5 + $0x8] sm:$0xf]
    %v71 = vld [vmem:[#allocation5 + $0xc] sm:$0xf]
    %v72 = vld [vmem:[#allocation5 + $0x10] sm:$0xf]
    %v73 = vld [vmem:[#allocation5 + $0x14] sm:$0xf]
    %v74 = vld [vmem:[#allocation5 + $0x18] sm:$0xf]
    %v75 = vld [vmem:[#allocation5 + $0x1c] sm:$0xf]
    %v76 = vld [vmem:[#allocation5 + $0x20] sm:$0xf]
    %v77 = vld [vmem:[#allocation5 + $0x24] sm:$0xf]
    %v78 = vld [vmem:[#allocation5 + $0x28] sm:$0xf]
    %v79 = vld [vmem:[#allocation5 + $0x2c] sm:$0xf]
    %v80 = vld [vmem:[#allocation5 + $0x30] sm:$0xf]
    %v81 = vld [vmem:[#allocation5 + $0x34] sm:$0xf]
    %v82 = vld [vmem:[#allocation5 + $0x38] sm:$0xf]
    %v83 = vld [vmem:[#allocation5 + $0x3c] sm:$0xf]
    %v84 = vld [vmem:[%s2] sm:$0x1]
    %v86 = vlaneseq
    %v87 = vshrl.u32 %v86, 7
    %v88 = vsub.s32 0, %v87
    %v89 = vrot.slane %v84, %v88
    %v93 = vunpack.c.l.b16 %v66
    %v94 = vunpack.c.l.b16 %v67
    %v95 = vpack.c.b16 %v94, %v93
    %v113 = vunpack.c.l.b16 %v68
    %v114 = vunpack.c.l.b16 %v69
    %v115 = vunpack.c.l.b16 %v70
    %v116 = vunpack.c.l.b16 %v71
    %v117 = vunpack.c.l.b16 %v72
    %v118 = vunpack.c.l.b16 %v73
    %v119 = vunpack.c.l.b16 %v74
    %v120 = vunpack.c.l.b16 %v75
    %v121 = vunpack.c.l.b16 %v76
    %v122 = vunpack.c.l.b16 %v77
    %v123 = vunpack.c.l.b16 %v78
    %v124 = vunpack.c.l.b16 %v79
    %v125 = vunpack.c.l.b16 %v80
    %v126 = vunpack.c.l.b16 %v81
    %v127 = vunpack.c.l.b16 %v82
    %v128 = vunpack.c.l.b16 %v83
    %v129 = vpack.c.b16 %v114, %v113
    %v130 = vpack.c.b16 %v116, %v115
    %v131 = vpack.c.b16 %v118, %v117
    %v132 = vpack.c.b16 %v120, %v119
    %v133 = vpack.c.b16 %v122, %v121
    %v134 = vpack.c.b16 %v124, %v123
    %v135 = vpack.c.b16 %v126, %v125
    %v136 = vpack.c.b16 %v128, %v127
    %145 = vmatprep.subr.bf16.mxu0 0
    %146 = vmatpush1.bf16.msra.mxu0 %v136
    %147 = vmatprep.subr.bf16.mxu0 0
    %148 = vmatpush1.bf16.msra.mxu0 %v135
    %149 = vmatprep.subr.bf16.mxu0 0
    %150 = vmatpush1.bf16.msra.mxu0 %v134
    %151 = vmatprep.subr.bf16.mxu0 0
    %152 = vmatpush1.bf16.msra.mxu0 %v133
    %153 = vmatprep.subr.bf16.mxu0 0
    %154 = vmatpush1.bf16.msra.mxu0 %v132
    %155 = vmatprep.subr.bf16.mxu0 0
    %156 = vmatpush1.bf16.msra.mxu0 %v131
    %157 = vmatprep.subr.bf16.mxu0 0
    %158 = vmatpush1.bf16.msra.mxu0 %v130
    %159 = vmatprep.subr.bf16.mxu0 0
    %160 = vmatpush1.bf16.msra.mxu0 %v129
    %161 = vmatprep.subr.bf16.mxu0 0
    %162 = vmatpush2.bf16.msra.mxu0 0
    %163 = vmatprep.subr.bf16.mxu0 0
    %164 = vmatpush2.bf16.msra.mxu0 0
    %165 = vmatprep.subr.bf16.mxu0 0
    %166 = vmatpush2.bf16.msra.mxu0 0
    %167 = vmatprep.subr.bf16.mxu0 0
    %168 = vmatpush2.bf16.msra.mxu0 0
    %169 = vmatprep.subr.bf16.mxu0 0
    %170 = vmatpush2.bf16.msra.mxu0 0
    %171 = vmatprep.subr.bf16.mxu0 0
    %172 = vmatpush2.bf16.msra.mxu0 0
    %173 = vmatprep.subr.bf16.mxu0 0
    %174 = vmatpush2.bf16.msra.mxu0 0
    %175 = vmatprep.subr.bf16.mxu0 0
    %176 = vmatpush2.bf16.msra.mxu0 0
    %177 = vmatprep.mubr.bf16.mxu0 0
    %178 = vmatmul.mubr.bf16.gmra.mxu0 %v95
    %v179 = vpop.f32.mrf.mxu0
    %v180 = vadd.f32 %v89, %v179
    %v181 = vpop.f32.mrf.mxu0
    %v182 = vpop.f32.mrf.mxu0
    %v183 = vadd.f32 %v89, %v182
    %v184 = vpop.f32.mrf.mxu0
    %185 = vdwg.mxu0
    %v186 = vpack.c.bf16 %v183, %v180
    %v188 = vunpack.c.l.b16 %v186
    %v189 = vunpack.c.h.b16 %v186
    %v190 = vpack.c.b16 %v188, %v188
    %v191 = vpack.c.b16 %v189, %v189
    %194 = vst [vmem:[#allocation8] sm:$0xf] %v190
    %195 = vst [vmem:[#allocation8 + $0x4] sm:$0xf] %v191
    %v196 = vld [vmem:[#allocation7] sm:$0xf]
    %v197 = vld [vmem:[#allocation7 + $0x4] sm:$0xf]
    %v198 = vld [vmem:[#allocation7 + $0x8] sm:$0xf]
    %v199 = vld [vmem:[#allocation7 + $0xc] sm:$0xf]
    %v200 = vld [vmem:[#allocation7 + $0x10] sm:$0xf]
    %v201 = vld [vmem:[#allocation7 + $0x14] sm:$0xf]
    %v202 = vld [vmem:[#allocation7 + $0x18] sm:$0xf]
    %v203 = vld [vmem:[#allocation7 + $0x1c] sm:$0xf]
    %v204 = vld [vmem:[#allocation7 + $0x20] sm:$0xf]
    %v205 = vld [vmem:[#allocation7 + $0x24] sm:$0xf]
    %v206 = vld [vmem:[#allocation7 + $0x28] sm:$0xf]
    %v207 = vld [vmem:[#allocation7 + $0x2c] sm:$0xf]
    %v208 = vld [vmem:[#allocation7 + $0x30] sm:$0xf]
    %v209 = vld [vmem:[#allocation7 + $0x34] sm:$0xf]
    %v210 = vld [vmem:[#allocation7 + $0x38] sm:$0xf]
    %v211 = vld [vmem:[#allocation7 + $0x3c] sm:$0xf]
    %v212 = vld [vmem:[%s4] sm:$0x1]
    %v214 = vlaneseq
    %v215 = vshrl.u32 %v214, 7
    %v216 = vsub.s32 0, %v215
    %v217 = vrot.slane %v212, %v216
    %v235 = vunpack.c.l.b16 %v196
    %v236 = vunpack.c.l.b16 %v197
    %v237 = vunpack.c.l.b16 %v198
    %v238 = vunpack.c.l.b16 %v199
    %v239 = vunpack.c.l.b16 %v200
    %v240 = vunpack.c.l.b16 %v201
    %v241 = vunpack.c.l.b16 %v202
    %v242 = vunpack.c.l.b16 %v203
    %v243 = vunpack.c.l.b16 %v204
    %v244 = vunpack.c.l.b16 %v205
    %v245 = vunpack.c.l.b16 %v206
    %v246 = vunpack.c.l.b16 %v207
    %v247 = vunpack.c.l.b16 %v208
    %v248 = vunpack.c.l.b16 %v209
    %v249 = vunpack.c.l.b16 %v210
    %v250 = vunpack.c.l.b16 %v211
    %v251 = vpack.c.b16 %v236, %v235
    %v252 = vpack.c.b16 %v238, %v237
    %v253 = vpack.c.b16 %v240, %v239
    %v254 = vpack.c.b16 %v242, %v241
    %v255 = vpack.c.b16 %v244, %v243
    %v256 = vpack.c.b16 %v246, %v245
    %v257 = vpack.c.b16 %v248, %v247
    %v258 = vpack.c.b16 %v250, %v249
    %267 = vmatprep.subr.bf16.mxu0 0
    %268 = vmatpush1.bf16.msra.mxu0 %v258
    %269 = vmatprep.subr.bf16.mxu0 0
    %270 = vmatpush1.bf16.msra.mxu0 %v257
    %271 = vmatprep.subr.bf16.mxu0 0
    %272 = vmatpush1.bf16.msra.mxu0 %v256
    %273 = vmatprep.subr.bf16.mxu0 0
    %274 = vmatpush1.bf16.msra.mxu0 %v255
    %275 = vmatprep.subr.bf16.mxu0 0
    %276 = vmatpush1.bf16.msra.mxu0 %v254
    %277 = vmatprep.subr.bf16.mxu0 0
    %278 = vmatpush1.bf16.msra.mxu0 %v253
    %279 = vmatprep.subr.bf16.mxu0 0
    %280 = vmatpush1.bf16.msra.mxu0 %v252
    %281 = vmatprep.subr.bf16.mxu0 0
    %282 = vmatpush1.bf16.msra.mxu0 %v251
    %283 = vmatprep.subr.bf16.mxu0 0
    %284 = vmatpush2.bf16.msra.mxu0 0
    %285 = vmatprep.subr.bf16.mxu0 0
    %286 = vmatpush2.bf16.msra.mxu0 0
    %287 = vmatprep.subr.bf16.mxu0 0
    %288 = vmatpush2.bf16.msra.mxu0 0
    %289 = vmatprep.subr.bf16.mxu0 0
    %290 = vmatpush2.bf16.msra.mxu0 0
    %291 = vmatprep.subr.bf16.mxu0 0
    %292 = vmatpush2.bf16.msra.mxu0 0
    %293 = vmatprep.subr.bf16.mxu0 0
    %294 = vmatpush2.bf16.msra.mxu0 0
    %295 = vmatprep.subr.bf16.mxu0 0
    %296 = vmatpush2.bf16.msra.mxu0 0
    %297 = vmatprep.subr.bf16.mxu0 0
    %298 = vmatpush2.bf16.msra.mxu0 0
    %299 = vmatprep.mubr.bf16.mxu0 0
    %300 = vmatmul.mubr.bf16.gmra.mxu0 %v186
    %v301 = vpop.f32.mrf.mxu0
    %v302 = vadd.f32 %v217, %v301
    %v303 = vpop.f32.mrf.mxu0
    %v304 = vpop.f32.mrf.mxu0
    %v305 = vadd.f32 %v217, %v304
    %v306 = vpop.f32.mrf.mxu0
    %307 = vdwg.mxu0
    %v308 = vmax.f32 %v302, 0.0
    %v309 = vmax.f32 %v305, 0.0
    %v310 = vpack.c.bf16 %v309, %v308
    %v312 = vunpack.c.l.b16 %v310
    %v313 = vunpack.c.h.b16 %v310
    %v314 = vpack.c.b16 %v312, %v312
    %v315 = vpack.c.b16 %v313, %v313
    %318 = vst [vmem:[#allocation9] sm:$0xf] %v314
    %319 = vst [vmem:[#allocation9 + $0x4] sm:$0xf] %v315
    // Predicated region
    $region34: #{tpu_custom_call.1} parent=1 // pred_check
      _
    $region35: #{tpu_custom_call.1} parent=1 // pred_check_branch
      %321 = sbr.rel (0) target = $region37
    $region36: #{tpu_custom_call.1} parent=1 // pred_region
      %s323 = ssub.s32 128, 128
      %324 = vsyncadd [#allocation4], %s323
      %s325 = sshll.u32 [#allocation8], 4
      %s326 = int_to_ptr.vmem [resolvable:$true] %s325
      %331 = dma.vmem_to_hbm [thread:$0]  %s326, 128, %s5, [#allocation4], 64, 64, 4
    $region37: #{tpu_custom_call.1} parent=1 // pred_fallthru
      _
    // Predicated region
    $region38: #{tpu_custom_call.1} parent=1 // pred_check
      _
    $region39: #{tpu_custom_call.1} parent=1 // pred_check_branch
      %333 = sbr.rel (0) target = $region41
    $region40: #{tpu_custom_call.1} parent=1 // pred_region
      %s335 = ssub.s32 128, 128
      %336 = vsyncadd [#allocation10], %s335
      %s337 = sshll.u32 [#allocation9], 4
      %s338 = int_to_ptr.vmem [resolvable:$true] %s337
      %343 = dma.vmem_to_hbm [thread:$0]  %s338, 128, %s6, [#allocation10], 64, 64, 4
    $region41: #{tpu_custom_call.1} parent=1 // pred_fallthru
      _
    // Predicated region
    $region42: #{tpu_custom_call.1} parent=1 // pred_check
      _
    $region43: #{tpu_custom_call.1} parent=1 // pred_check_branch
      %345 = sbr.rel (0) target = $region45
    $region44: #{tpu_custom_call.1} parent=1 // pred_region
      %346 = dma.done [#allocation4], 128
    $region45: #{tpu_custom_call.1} parent=1 // pred_fallthru
      _
    // Predicated region
    $region46: #{tpu_custom_call.1} parent=1 // pred_check
      _
    $region47: #{tpu_custom_call.1} parent=1 // pred_check_branch
      %348 = sbr.rel (0) target = $region49
    $region48: #{tpu_custom_call.1} parent=1 // pred_region
      %349 = dma.done [#allocation10], 128
    $region49: #{tpu_custom_call.1} parent=1 // pred_fallthru
      _
    %350 = vsyncpa [#allocation3], 1
    %351 = vsyncpa [#allocation6], 1
    %352 = vsyncpa [#allocation4], 1
    %353 = vsyncpa [#allocation10], 1

</llo_original>
